<compile_context>
chip_gen: v7x
topology: tpu7x:2x2x1
jax: 0.10.0
libtpu: 0.0.40
codegen_flags: <defaults>
</compile_context>

<pallas_src>
import functools

import jax
import jax.numpy as jnp
from jax import lax
from jax.experimental import pallas as pl
from jax.experimental.pallas import tpu as pltpu


# ----------------------------------------------------------------------------
# Tiling helpers
# ----------------------------------------------------------------------------
def _pick_width_chunk(total_w, v, order, budget_bytes=12 * 1024 * 1024):
    """Lane chunk of the folded [V, B*L*C] nconv operand.

    Keeps (double-buffered input + `order` hop outputs) within ~budget so the
    block also fits v7x's smaller VMEM (64 MiB physical / 32 MiB scoped),
    while v5e/v6e can take the same or larger chunks.  Returns the full width
    or a multiple of 128 dividing it.
    """
    bytes_per_col = 4 * v * (1 + order) * 2          # x + hop outs, 2x buffered
    max_cols = max(128, budget_bytes // max(bytes_per_col, 1))
    if total_w <= 128 or total_w <= max_cols:
        return total_w
    c = (max_cols // 128) * 128
    while c >= 128:
        if total_w % c == 0:
            return c
        c -= 128
    return total_w                                    # fallback: no chunking


def _pick_node_tile(n, max_tn=128, min_steps=4):
    """Node tile for the meta kernel: multiple of 8 (sublane rule for the 2-D
    mk block), sized so the 1-D grid has several steps (pipelining overlap and
    >= 2x cores for v7x) rather than grid=(1,)."""
    if n <= 8:
        return n
    tn = min(max_tn, (n // 8) * 8)
    while tn > 8 and pl.cdiv(n, tn) < min_steps:
        tn -= 8
    return tn


# ----------------------------------------------------------------------------
# Kernel 1: fused nconv hops.
#   For support s and a width chunk of X=[V, B*L*C]:  y1 = A^T X, y2 = A^T y1.
#   Both hops are written from one kernel; the intermediate never hits HBM.
# ----------------------------------------------------------------------------
def _nconv_hops_kernel(a_ref, x_ref, o_ref, *, order):
    # a_ref: (1, V, V)   x_ref: (V, WC)   o_ref: (1, order, V, WC)
    a = a_ref[0]                                     # [V, V]
    y = x_ref[...]                                   # [V, WC]; bf16 inputs would
    for k in range(order):                           # hit the full-rate MXU path
        # y_new[w, :] = sum_v A[v, w] * y[v, :]  ==  A^T @ y
        y = lax.dot_general(a, y, (((0,), (0,)), ((), ())),
                            preferred_element_type=jnp.float32)
        o_ref[0, k] = y.astype(o_ref.dtype)


def nconv_hops(x_mat, a_stack, *, order, width_chunk=None):
    """x_mat: [V, B*L*C], a_stack: [S, V, V] -> hops: [S, order, V, B*L*C]."""
    S, V, _ = a_stack.shape
    _, W = x_mat.shape
    wc = width_chunk or _pick_width_chunk(W, V, order)
    kernel = functools.partial(_nconv_hops_kernel, order=order)
    return pl.pallas_call(
        kernel,
        out_shape=jax.ShapeDtypeStruct((S, order, V, W), x_mat.dtype),
        # Width-chunk OUTER, support INNER: the X block index depends only on
        # the outer axis, so it is NOT re-fetched across the S inner steps —
        # only the tiny A [V, V] moves per step.
        grid=(pl.cdiv(W, wc), S),
        in_specs=[
            pl.BlockSpec((1, V, V), lambda w, s: (s, 0, 0)),
            pl.BlockSpec((V, wc), lambda w, s: (0, w)),
        ],
        out_specs=pl.BlockSpec((1, order, V, wc), lambda w, s: (s, 0, 0, w)),
        compiler_params=pltpu.CompilerParams(
            dimension_semantics=("parallel", "parallel"),
            vmem_limit_bytes=32 * 1024 * 1024),
    )(a_stack, x_mat)


# ----------------------------------------------------------------------------
# Kernel 2: fused per-node-block meta conv (MetaConv2d_update, kernel_size=1).
# For a block of TN nodes (everything below stays in VMEM):
#   h        = [x | hop_0 | ... | hop_{H-1}]        (assembled in scratch)
#   a1[n]    = mk[n] @ W1^T + b1                    (fused w1 linear)
#   w_node[n]= a1[n] @ W2^T + b2
#   bias[n]  = mk[n] @ Wb^T + bb
#   out[n]   = h[n] @ w_node[n] + bias[n]
# ----------------------------------------------------------------------------
def _meta_node_kernel(x_ref, hops_ref, mk_ref, w1t_ref, b1_ref, w2t_ref,
                      b2_ref, wbt_ref, bb_ref, o_ref, h_scr, a1_scr, *,
                      n_hops):
    TN, L, C = x_ref.shape
    D, Cout = w2t_ref.shape
    C_total = (n_hops + 1) * C

    # Assemble h = [x, hop_0, ..., hop_{H-1}] in VMEM (no HBM concat of h).
    h_scr[:, :, 0:C] = x_ref[...].astype(h_scr.dtype)
    for j in range(n_hops):
        h_scr[:, :, (j + 1) * C:(j + 2) * C] = hops_ref[j].astype(h_scr.dtype)

    mk = mk_ref[...]                                         # [TN, Dm]

    # Fused w1 linear: one lane-dense matmul; a1 never leaves VMEM.
    a1 = jnp.dot(mk, w1t_ref[...],
                 preferred_element_type=jnp.float32) + b1_ref[...]   # [TN, C_total*D]
    # Regroup [TN, C_total*D] -> [TN, C_total, D] with cheap slice stores
    # (avoids a minor-dim-splitting value reshape).
    for c in range(C_total):
        a1_scr[:, c, :] = a1[:, c * D:(c + 1) * D]

    # Per-node weights  w_node[n] = a1[n] @ W2^T + b2  (single 2-D matmul).
    a1_2d = a1_scr[...].reshape(TN * C_total, D)             # leading-dim collapse
    w_node = jnp.dot(a1_2d, w2t_ref[...],
                     preferred_element_type=jnp.float32) + b2_ref[...]
    w_node = w_node.reshape(TN, C_total, Cout)               # leading-dim split

    # Per-node bias (fused, no separate linear call).
    b_node = jnp.dot(mk, wbt_ref[...],
                     preferred_element_type=jnp.float32) + bb_ref[...]   # [TN, Cout]

    # Apply per-node weights, batched over the node dim.
    # TODO(synk): per review this lowers to TN small matmuls; verify with a
    # bundle dump that the MXU-push slot is binding before restructuring to a
    # node-on-lane VPU formulation.
    out = lax.dot_general(h_scr[...], w_node, (((2,), (1,)), ((0,), (0,))),
                          preferred_element_type=jnp.float32)
    o_ref[...] = (out + b_node[:, None, :]).astype(o_ref.dtype)


def meta_node_apply(x_nodes, hops_nodes, mk, w1, b1, w2, b2, wb, bb, *,
                    max_tn=128):
    """x_nodes: [N, L, C], hops_nodes: [H, N, L, C], mk: [N, Dm] -> [N, L, Cout]."""
    N, L, C = x_nodes.shape
    H = hops_nodes.shape[0]
    Dm = mk.shape[1]
    Cout, D = w2.shape
    CtD = w1.shape[0]
    C_total = (H + 1) * C
    assert CtD == C_total * D, "w1 does not match (1 + S*order) * c_in * meta_dim"

    TN = _pick_node_tile(N, max_tn=max_tn)

    # One-time weight pre-transposes (resident weights; every in-kernel dot is
    # a plain lhs-last/rhs-first contraction on a lane-dense RHS).
    w1t = w1.T                      # [Dm, C_total*D]
    w2t = w2.T                      # [D, Cout]
    wbt = wb.T                      # [Dm, Cout]

    kernel = functools.partial(_meta_node_kernel, n_hops=H)
    return pl.pallas_call(
        kernel,
        out_shape=jax.ShapeDtypeStruct((N, L, Cout), x_nodes.dtype),
        grid=(pl.cdiv(N, TN),),
        in_specs=[
            pl.BlockSpec((TN, L, C), lambda i: (i, 0, 0)),
            pl.BlockSpec((H, TN, L, C), lambda i: (0, i, 0, 0)),
            pl.BlockSpec((TN, Dm), lambda i: (i, 0)),
            pl.BlockSpec((Dm, CtD), lambda i: (0, 0)),       # resident weights
            pl.BlockSpec((1, CtD), lambda i: (0, 0)),
            pl.BlockSpec((D, Cout), lambda i: (0, 0)),
            pl.BlockSpec((1, Cout), lambda i: (0, 0)),
            pl.BlockSpec((Dm, Cout), lambda i: (0, 0)),
            pl.BlockSpec((1, Cout), lambda i: (0, 0)),
        ],
        out_specs=pl.BlockSpec((TN, L, Cout), lambda i: (i, 0, 0)),
        scratch_shapes=[pltpu.VMEM((TN, L, C_total), jnp.float32),
                        pltpu.VMEM((TN, C_total, D), jnp.float32)],
        compiler_params=pltpu.CompilerParams(
            dimension_semantics=("parallel",),
            vmem_limit_bytes=32 * 1024 * 1024),
    )(x_nodes, hops_nodes, mk, w1t, b1.reshape(1, CtD), w2t,
      b2.reshape(1, Cout), wbt, bb.reshape(1, Cout))


# ----------------------------------------------------------------------------
# meta_gcn forward
# ----------------------------------------------------------------------------
def meta_gcn_forward(params, meta_knowledge, x, supports, order=2):
    B, C, V, L = x.shape
    S = len(supports)
    a_stack = jnp.stack(supports, axis=0)                  # [S, V, V]

    # v-major node layout (node n = v*B + b): one transpose of the SMALL input
    # only; hops and x then feed the meta kernel via free reshapes.
    xp = jnp.transpose(x, (2, 0, 3, 1))                    # [V, B, L, C]
    x_mat = xp.reshape(V, B * L * C)

    hops = nconv_hops(x_mat, a_stack, order=order)         # [S, order, V, B*L*C]

    N = V * B
    x_nodes = xp.reshape(N, L, C)
    hops_nodes = hops.reshape(S * order, N, L, C)          # free (v-major) reshape
    Dm = meta_knowledge.shape[-1]
    mk = jnp.transpose(meta_knowledge, (1, 0, 2)).reshape(N, Dm)   # small

    out = meta_node_apply(x_nodes, hops_nodes, mk,
                          params["w1"], params["b1"], params["w2"], params["b2"],
                          params["wb"], params["bb"])      # [N, L, Cout]
    Cout = params["w2"].shape[0]
    out = out.reshape(V, B, L, Cout)

    # TODO(synk): F.dropout skipped (inference semantics; no RNG dropout here)
    return jnp.transpose(out, (1, 3, 0, 2))                # [B, Cout, V, L]


# ----------------------------------------------------------------------------
# Pure-JAX reference (for correctness check)
# ----------------------------------------------------------------------------
def meta_gcn_reference(params, meta_knowledge, x, supports, order=2):
    out = [x]
    for a in supports:
        x1 = jnp.einsum('ncvl,vw->ncwl', x, a)
        out.append(x1)
        for _k in range(2, order + 1):
            x2 = jnp.einsum('ncvl,vw->ncwl', x1, a)
            out.append(x2)
            x1 = x2
    h = jnp.concatenate(out, axis=1)
    B, Cin, V, L = h.shape
    D = meta_knowledge.shape[-1]
    Cout = params["w2"].shape[0]
    N = B * V
    mk = meta_knowledge.reshape(N, D)
    a1 = (mk @ params["w1"].T + params["b1"]).reshape(N, Cin, D)
    w_node = a1 @ params["w2"].T + params["b2"]             # [N, Cin, Cout]
    b_node = mk @ params["wb"].T + params["bb"]             # [N, Cout]
    h_nlc = jnp.transpose(h, (0, 2, 3, 1)).reshape(N, L, Cin)
    o = jnp.einsum('nlc,nco->nlo', h_nlc, w_node) + b_node[:, None, :]
    return jnp.transpose(o.reshape(B, V, L, Cout), (0, 3, 1, 2))


# ----------------------------------------------------------------------------
# main
# ----------------------------------------------------------------------------
if __name__ == "__main__":
    # Full-precision f32 matmuls for the pure-JAX reference so the comparison
    # can be tight (the default TPU matmul precision is bf16-pass based).
    jax.config.update("jax_default_matmul_precision", "highest")

    # small shapes (production: V~200+, L=12-13, C=32-64, B=32-64 — retune there)
    B, c_in, V, L = 2, 4, 16, 8       # batch, input channels, nodes, seq len
    meta_dim = 32
    support_len, order = 3, 2
    c_out = 8
    c_in_total = (order * support_len + 1) * c_in   # 28

    key = jax.random.PRNGKey(0)
    keys = jax.random.split(key, 10)

    x = jax.random.normal(keys[0], (B, c_in, V, L), dtype=jnp.float32)
    meta_knowledge = jax.random.normal(keys[1], (B, V, meta_dim), dtype=jnp.float32)
    supports = [
        jax.random.normal(keys[2 + i], (V, V), dtype=jnp.float32) * 0.2
        for i in range(support_len)
    ]

    # Deterministic parameter init (nn.Linear-like scaling: 1/sqrt(fan_in)).
    def _init(k, shape, fan_in):
        return jax.random.normal(k, shape, dtype=jnp.float32) * (1.0 / jnp.sqrt(fan_in))

    params = {
        # w1_linear: Linear(meta_dim, c_in_total * meta_dim)
        "w1": _init(keys[5], (c_in_total * meta_dim, meta_dim), meta_dim),
        "b1": _init(keys[6], (c_in_total * meta_dim,), meta_dim),
        # w2_linear: Linear(meta_dim, c_out * kernel_size=1)
        "w2": _init(keys[7], (c_out, meta_dim), meta_dim),
        "b2": _init(keys[8], (c_out,), meta_dim),
        # b_linear: Linear(meta_dim, c_out)
        "wb": _init(keys[9], (c_out, meta_dim), meta_dim),
        "bb": jnp.zeros((c_out,), dtype=jnp.float32),
    }

    out = meta_gcn_forward(params, meta_knowledge, x, supports, order=order)
    out = jax.block_until_ready(out)

    ref = meta_gcn_reference(params, meta_knowledge, x, supports, order=order)
    ref = jax.block_until_ready(ref)

    assert out.shape == (B, c_out, V, L), f"bad output shape {out.shape}"
    # tight f32 tolerance (was 2e-2); atol covers summation-order noise on
    # near-cancelling elements whose intermediates are O(10).
    assert jnp.allclose(out, ref, rtol=1e-5, atol=1e-4), "mismatch vs reference"

    print("KERNEL_OK")
</pallas_src>

<mosaic_0001>
module attributes {stable_mosaic.version = 11 : i64} {
  func.func @_nconv_hops_kernel(%arg0: i32, %arg1: i32, %arg2: memref<1x16x16xf32, #tpu.memory_space<vmem>>, %arg3: memref<16x64xf32, #tpu.memory_space<vmem>>, %arg4: memref<1x2x16x64xf32, #tpu.memory_space<vmem>>) attributes {dimension_semantics = [#tpu.dimension_semantics<parallel>, #tpu.dimension_semantics<parallel>], iteration_bounds = array<i64: 1, 3>, scalar_prefetch = 0 : i64, scratch_operands = 0 : i64, tpu.core_type = #tpu.core_type<tc>, window_params = [{transform_indices = @transform_0, window_bounds = array<i64: 1, 16, 16>}, {transform_indices = @transform_1, window_bounds = array<i64: 16, 64>}, {transform_indices = @transform_2, window_bounds = array<i64: 1, 2, 16, 64>}]} {
    %c0 = arith.constant 0 : index
    %c0_0 = arith.constant 0 : index
    %c0_1 = arith.constant 0 : index
    %0 = vector.load %arg2[%c0, %c0_0, %c0_1] : memref<1x16x16xf32, #tpu.memory_space<vmem>>, vector<1x16x16xf32>
    %1 = vector.shape_cast %0 : vector<1x16x16xf32> to vector<16x16xf32>
    %c0_2 = arith.constant 0 : index
    %c0_3 = arith.constant 0 : index
    %2 = vector.load %arg3[%c0_2, %c0_3] : memref<16x64xf32, #tpu.memory_space<vmem>>, vector<16x64xf32>
    %cst = arith.constant dense<0.000000e+00> : vector<16x64xf32>
    %3 = tpu.matmul %1, %2, %cst {dimension_numbers = #tpu.dot_dimension_numbers<[0], [0], [1], [1], [0, 1, 1, 1], [], []>, precision = #tpu.contract_precision<fp32>} : vector<16x16xf32>, vector<16x64xf32>, vector<16x64xf32> -> vector<16x64xf32>
    %c0_4 = arith.constant 0 : index
    %c0_5 = arith.constant 0 : index
    %c0_6 = arith.constant 0 : index
    %c0_7 = arith.constant 0 : index
    %4 = vector.load %arg4[%c0_4, %c0_5, %c0_6, %c0_7] : memref<1x2x16x64xf32, #tpu.memory_space<vmem>>, vector<1x1x16x64xf32>
    %5 = vector.shape_cast %4 : vector<1x1x16x64xf32> to vector<16x64xf32>
    %6 = vector.shape_cast %3 : vector<16x64xf32> to vector<1x1x16x64xf32>
    tpu.vector_store %arg4[%c0_4, %c0_5, %c0_6, %c0_7], %6 {strides = array<i32>} : memref<1x2x16x64xf32, #tpu.memory_space<vmem>>, vector<1x1x16x64xf32>,
    %cst_8 = arith.constant dense<0.000000e+00> : vector<16x64xf32>
    %7 = tpu.matmul %1, %3, %cst_8 {dimension_numbers = #tpu.dot_dimension_numbers<[0], [0], [1], [1], [0, 1, 1, 1], [], []>, precision = #tpu.contract_precision<fp32>} : vector<16x16xf32>, vector<16x64xf32>, vector<16x64xf32> -> vector<16x64xf32>
    %c0_9 = arith.constant 0 : index
    %c1 = arith.constant 1 : index
    %c0_10 = arith.constant 0 : index
    %c0_11 = arith.constant 0 : index
    %8 = vector.load %arg4[%c0_9, %c1, %c0_10, %c0_11] : memref<1x2x16x64xf32, #tpu.memory_space<vmem>>, vector<1x1x16x64xf32>
    %9 = vector.shape_cast %8 : vector<1x1x16x64xf32> to vector<16x64xf32>
    %10 = vector.shape_cast %7 : vector<16x64xf32> to vector<1x1x16x64xf32>
    tpu.vector_store %arg4[%c0_9, %c1, %c0_10, %c0_11], %10 {strides = array<i32>} : memref<1x2x16x64xf32, #tpu.memory_space<vmem>>, vector<1x1x16x64xf32>,
    return
  }
  func.func @transform_0(%arg0: i32, %arg1: i32) -> (i32, i32, i32) {
    %c0_i32 = arith.constant 0 : i32
    %c0_i32_0 = arith.constant 0 : i32
    %c0_i32_1 = arith.constant 0 : i32
    return %arg1, %c0_i32, %c0_i32_0 : i32, i32, i32
  }
  func.func @transform_1(%arg0: i32, %arg1: i32) -> (i32, i32) {
    %c0_i32 = arith.constant 0 : i32
    %c0_i32_0 = arith.constant 0 : i32
    return %c0_i32, %arg0 : i32, i32
  }
  func.func @transform_2(%arg0: i32, %arg1: i32) -> (i32, i32, i32, i32) {
    %c0_i32 = arith.constant 0 : i32
    %c0_i32_0 = arith.constant 0 : i32
    %c0_i32_1 = arith.constant 0 : i32
    return %arg1, %c0_i32, %c0_i32_0, %arg0 : i32, i32, i32, i32
  }
}

</mosaic_0001>

<llo_original>
// kernel: tpu_custom_call.1
$region0: #{tpu_custom_call.1}
  #allocation0 [shape = 'u32[]', space=smem, size = 0x4, offset = 0x4, fixed_abs, tag = 'smem constant byte address 0x4 - core index']
  #allocation1 [shape = 'u32[144,128]{1,0:T(1,128)}', space=vmem, size = 0x12000, scoped, tag = 'internal scratch']
  %s0 = inlined_call_operand.hbm [shape: f32[3,16,16], index: 0, kind: input, shape index: {}]
  %s1 = inlined_call_operand.hbm [shape: f32[16,64], index: 1, kind: input, shape index: {}]
  %s2 = inlined_call_operand.hbm [shape: f32[3,2,16,64], index: 2, kind: output, shape index: {}]
  %s3 = sld [smem:[#allocation0]]
  $region49: #{tpu_custom_call.1} parent=0
    _
  %s5 = ssub.s32 1, %s3
  %s6 = scalar_select 0, %s5, %s3
  $region1: #{tpu_custom_call.1} parent=0
    #allocation2 [shape = 'u8[16384]{0}', space=vmem, size = 0x4000, scoped, tag = 'input window, operand 0']
    #allocation3 [shape = 's32[2]{0}', space=sflag, size = 0x8, scoped, tag = 'scoped memory for tpu_custom_call.1']
    #allocation4 [shape = 's32[2]{0}', space=sflag, size = 0x8, scoped, tag = 'scoped memory for tpu_custom_call.1']
    #allocation5 [shape = 'u8[8192]{0}', space=vmem, size = 0x2000, scoped, tag = 'input window, operand 1, single buffered']
    #allocation6 [shape = 's32[1]{0}', space=sflag, size = 0x4, scoped, tag = 'scoped memory for tpu_custom_call.1']
    #allocation7 [shape = 'u8[32768]{0}', space=vmem, size = 0x8000, scoped, tag = 'output window, operand 0']
    %7 = vsyncpa [#allocation3], 0
    %s8 = scalar_lea.sflag [#allocation3], 1
    %9 = vsyncpa %s8, 0
    %10 = vsyncpa [#allocation6], 0
    %11 = vsyncpa [#allocation4], 0
    %s12 = scalar_lea.sflag [#allocation4], 1
    %13 = vsyncpa %s12, 0
    loop: start=0, step=1, limit=5
    $region2: #{tpu_custom_call.1} parent=1 // loop_pre_header
      _
    $region3: #{tpu_custom_call.1} parent=1 // loop_header
      %s15 = sphi 0, %s19
      %p16 = scmp.ge.s32.totalorder %s15, 5
      %s22 = sphi 0, %s34
      %s23 = sphi 0, %s30
      %s24 = sphi 0, %s22
      %s25 = sphi 0, %s23
      %s26 = sphi 0, %s24
      %s27 = sphi 0, %s25
      %s37 = sphi 0, %s39
      %s40 = sphi 0, %s37
      %s41 = sphi 0, %s40
      %s57 = sphi 0, %s41
      %s63 = sphi 0, %s65
      %s66 = sphi 0, %s63
      %s67 = sphi 0, %s66
      %s83 = sphi 0, %s67
      %s91 = sphi 0, %s93
      %s94 = sphi 0, %s91
      %s95 = sphi 0, %s94
      %s111 = sphi 0, %s95
    $region4: #{tpu_custom_call.1} parent=1 // loop_header_branch
      %18 = sbr.rel (%p16) target = $region8
    $region5: #{tpu_custom_call.1} parent=1 // loop_body
      %s20 = ssub.s32 %s15, 1
      %s21 = ssub.s32 %s15, 2
      %s28 = sadd.s32 1, %s23
      %p29 = scmp.ge.s32.totalorder %s28, 3
      %s30 = scalar_select %p29, 0, %s28
      %s31 = sadd.s32 1, %s22
      %s32 = scalar_select %p29, %s31, %s22
      %p33 = scmp.ge.s32.totalorder %s32, 1
      %s34 = scalar_select %p33, 0, %s32
      %s35 = ssub.s32 %s23, %s30
      %p36 = scmp.eq.s32.totalorder %s35, 0
      %s38 = sadd.s32 %s37, 1
      %s39 = scalar_select %p36, %s37, %s38
      %p42 = pneg %p36
      %p43 = scmp.eq.s32.totalorder %s15, 2
      %p44 = por %p42, %p43
      %p45 = scmp.ne.s32.totalorder %s37, %s40
      %p46 = scmp.eq.s32.totalorder %s15, 0
      %p47 = por %p45, %p46
      %p48 = scmp.ne.s32.totalorder %s37, %s40
      %p49 = scmp.eq.s32.totalorder %s20, 2
      %p50 = por %p48, %p49
      %p51 = scmp.ne.s32.totalorder %s40, %s41
      %p52 = scmp.eq.s32.totalorder %s20, 0
      %p53 = por %p51, %p52
      %p54 = scmp.ne.s32.totalorder %s40, %s41
      %p55 = scmp.eq.s32.totalorder %s21, 2
      %p56 = por %p54, %p55
      %p58 = scmp.ne.s32.totalorder %s41, %s57
      %p59 = scmp.eq.s32.totalorder %s21, 0
      %p60 = por %p58, %p59
      %s61 = ssub.s32 %s22, %s34
      %p62 = scmp.eq.s32.totalorder %s61, 0
      %s64 = sadd.s32 %s63, 1
      %s65 = scalar_select %p62, %s63, %s64
      %p68 = pneg %p62
      %p69 = scmp.eq.s32.totalorder %s15, 2
      %p70 = por %p68, %p69
      %p71 = scmp.ne.s32.totalorder %s63, %s66
      %p72 = scmp.eq.s32.totalorder %s15, 0
      %p73 = por %p71, %p72
      %p74 = scmp.ne.s32.totalorder %s63, %s66
      %p75 = scmp.eq.s32.totalorder %s20, 2
      %p76 = por %p74, %p75
      %p77 = scmp.ne.s32.totalorder %s66, %s67
      %p78 = scmp.eq.s32.totalorder %s20, 0
      %p79 = por %p77, %p78
      %p80 = scmp.ne.s32.totalorder %s66, %s67
      %p81 = scmp.eq.s32.totalorder %s21, 2
      %p82 = por %p80, %p81
      %p84 = scmp.ne.s32.totalorder %s67, %s83
      %p85 = scmp.eq.s32.totalorder %s21, 0
      %p86 = por %p84, %p85
      %s87 = ssub.s32 %s23, %s30
      %s88 = ssub.s32 %s22, %s34
      %s89 = sor.u32 %s87, %s88
      %p90 = scmp.eq.s32.totalorder %s89, 0
      %s92 = sadd.s32 %s91, 1
      %s93 = scalar_select %p90, %s91, %s92
      %p96 = pneg %p90
      %p97 = scmp.eq.s32.totalorder %s15, 2
      %p98 = por %p96, %p97
      %p99 = scmp.ne.s32.totalorder %s91, %s94
      %p100 = scmp.eq.s32.totalorder %s15, 0
      %p101 = por %p99, %p100
      %p102 = scmp.ne.s32.totalorder %s91, %s94
      %p103 = scmp.eq.s32.totalorder %s20, 2
      %p104 = por %p102, %p103
      %p105 = scmp.ne.s32.totalorder %s94, %s95
      %p106 = scmp.eq.s32.totalorder %s20, 0
      %p107 = por %p105, %p106
      %p108 = scmp.ne.s32.totalorder %s94, %s95
      %p109 = scmp.eq.s32.totalorder %s21, 2
      %p110 = por %p108, %p109
      %p112 = scmp.ne.s32.totalorder %s95, %s111
      %p113 = scmp.eq.s32.totalorder %s21, 0
      %p114 = por %p112, %p113
      %p115 = scmp.le.s32.totalorder 1, %s15
      %p116 = scmp.lt.s32.totalorder %s15, 4
      %p117 = pnand %p115, %p116
      %p118 = pneg %p117
      // Predicated region
      $region9: #{tpu_custom_call.1} parent=5 // pred_check
        _
      $region10: #{tpu_custom_call.1} parent=5 // pred_check_branch
        %120 = sbr.rel (%p117) target = $region12
      $region11: #{tpu_custom_call.1} parent=5 // pred_region
        %s121 = ssub.s32 %s15, 1
        // Predicated region
        $region13: #{tpu_custom_call.1} parent=11 // pred_check
          %p122 = pneg %p79
        $region14: #{tpu_custom_call.1} parent=11 // pred_check_branch
          %124 = sbr.rel (%p122) target = $region16
        $region15: #{tpu_custom_call.1} parent=11 // pred_region
          %s126 = ssub.s32 256, 256
          %127 = vsyncadd [#allocation6], %s126
          %s128 = smul.addr %s24, 128
          %s129 = scalar_lea.hbm %s1, %s128
          %s130 = sshll.u32 [#allocation5], 4
          %s131 = int_to_ptr.vmem [resolvable:$true] %s130
          %136 = dma.hbm_to_vmem [thread:$0]  %s129, 256, %s131, [#allocation6], 128, 128, 8
        $region16: #{tpu_custom_call.1} parent=11 // pred_fallthru
          _
      $region12: #{tpu_custom_call.1} parent=5 // pred_fallthru
        _
      %p137 = scmp.lt.s32.totalorder %s15, 3
      // Predicated region
      $region17: #{tpu_custom_call.1} parent=5 // pred_check
        %p138 = pneg %p137
      $region18: #{tpu_custom_call.1} parent=5 // pred_check_branch
        %140 = sbr.rel (%p138) target = $region20
      $region19: #{tpu_custom_call.1} parent=5 // pred_region
        // Predicated region
        $region21: #{tpu_custom_call.1} parent=19 // pred_check
          %p141 = pneg %p47
        $region22: #{tpu_custom_call.1} parent=19 // pred_check_branch
          %143 = sbr.rel (%p141) target = $region24
        $region23: #{tpu_custom_call.1} parent=19 // pred_region
          %s144 = sand.u32 %s37, 1
          %s145 = scalar_lea.sflag [#allocation3], %s144
          %s146 = sand.u32 %s37, 1
          %s147 = smul.addr %s146, 16
          %s148 = scalar_lea.vmem [#allocation2], %s147
          %s150 = ssub.s32 256, 256
          %151 = vsyncadd %s145, %s150
          %s152 = smul.addr %s23, 2
          %s153 = smul.addr %s152, 128
          %s154 = scalar_lea.hbm %s0, %s153
          %s155 = sshll.u32 %s148, 4
          %s156 = int_to_ptr.vmem [resolvable:$true] %s155
          %161 = dma.hbm_to_vmem [thread:$0]  %s154, 256, %s156, %s145, 128, 128, 8
        $region24: #{tpu_custom_call.1} parent=19 // pred_fallthru
          _
      $region20: #{tpu_custom_call.1} parent=5 // pred_fallthru
        _
      %p162 = scmp.le.s32.totalorder 1, %s15
      %p163 = scmp.lt.s32.totalorder %s15, 4
      %p164 = pnand %p162, %p163
      %p165 = pneg %p164
      // Predicated region
      $region25: #{tpu_custom_call.1} parent=5 // pred_check
        _
      $region26: #{tpu_custom_call.1} parent=5 // pred_check_branch
        %167 = sbr.rel (%p164) target = $region28
      $region27: #{tpu_custom_call.1} parent=5 // pred_region
        %s168 = ssub.s32 %s15, 1
        %s169 = sand.u32 %s40, 1
        %s170 = scalar_lea.sflag [#allocation3], %s169
        %s171 = sand.u32 %s40, 1
        %s172 = smul.addr %s171, 16
        %s173 = scalar_lea.vmem [#allocation2], %s172
        // Predicated region
        $region29: #{tpu_custom_call.1} parent=27 // pred_check
          %p174 = pneg %p53
        $region30: #{tpu_custom_call.1} parent=27 // pred_check_branch
          %176 = sbr.rel (%p174) target = $region32
        $region31: #{tpu_custom_call.1} parent=27 // pred_region
          %177 = dma.done %s170, 256
        $region32: #{tpu_custom_call.1} parent=27 // pred_fallthru
          _
        // Predicated region
        $region33: #{tpu_custom_call.1} parent=27 // pred_check
          %p178 = pneg %p79
        $region34: #{tpu_custom_call.1} parent=27 // pred_check_branch
          %180 = sbr.rel (%p178) target = $region36
        $region35: #{tpu_custom_call.1} parent=27 // pred_region
          %181 = dma.done [#allocation6], 256
        $region36: #{tpu_custom_call.1} parent=27 // pred_fallthru
          _
        %s182 = sand.u32 %s40, 1
        %s183 = scalar_lea.sflag [#allocation3], %s182
        %s184 = sand.u32 %s40, 1
        %s185 = smul.addr %s184, 16
        %s186 = scalar_lea.vmem [#allocation2], %s185
        %p187 = pneg %p53
        %p188 = pneg %p50
        %p189 = pneg %p79
        %p190 = pneg %p76
        %p191 = pneg %p107
        %p192 = pneg %p104
        %s193 = sand.u32 %s94, 1
        %s194 = scalar_lea.sflag [#allocation4], %s193
        %s195 = sand.u32 %s94, 1
        %s196 = smul.addr %s195, 32
        %s197 = scalar_lea.vmem [#allocation7], %s196
        %v198 = vld [vmem:[%s173] sm:$0xff]
        %v199 = vld [vmem:[%s173 + $0x8] sm:$0xff]
        %v200 = vld [vmem:[#allocation5] sm:$0xff]
        %v201 = vld [vmem:[#allocation5 + $0x8] sm:$0xff]
        %202 = vxpose.xlu0.b32.start [1/16] %v198, 128
        %203 = vxpose.xlu0.b32.cont [2/16] %v199, 128
        %204 = vxpose.xlu0.b32.cont [3/16] 0.0, 128
        %205 = vxpose.xlu0.b32.cont [4/16] 0.0, 128
        %206 = vxpose.xlu0.b32.cont [5/16] 0.0, 128
        %207 = vxpose.xlu0.b32.cont [6/16] 0.0, 128
        %208 = vxpose.xlu0.b32.cont [7/16] 0.0, 128
        %209 = vxpose.xlu0.b32.cont [8/16] 0.0, 128
        %210 = vxpose.xlu0.b32.cont [9/16] 0.0, 128
        %211 = vxpose.xlu0.b32.cont [10/16] 0.0, 128
        %212 = vxpose.xlu0.b32.cont [11/16] 0.0, 128
        %213 = vxpose.xlu0.b32.cont [12/16] 0.0, 128
        %214 = vxpose.xlu0.b32.cont [13/16] 0.0, 128
        %215 = vxpose.xlu0.b32.cont [14/16] 0.0, 128
        %216 = vxpose.xlu0.b32.cont [15/16] 0.0, 128
        %217 = vxpose.xlu0.b32.end [16/16] 0.0, 128
        %v218 = vpop.trf.xlu0
        %v219 = vpop.trf.xlu0
        %v220 = vpop.trf.xlu0
        %v221 = vpop.trf.xlu0
        %v222 = vpop.trf.xlu0
        %v223 = vpop.trf.xlu0
        %v224 = vpop.trf.xlu0
        %v225 = vpop.trf.xlu0
        %v226 = vpop.trf.xlu0
        %v227 = vpop.trf.xlu0
        %v228 = vpop.trf.xlu0
        %v229 = vpop.trf.xlu0
        %v230 = vpop.trf.xlu0
        %v231 = vpop.trf.xlu0
        %v232 = vpop.trf.xlu0
        %v233 = vpop.trf.xlu0
        %vm234 = vcmask 130048
        %v236 = vsel %vm234, %v218, 0
        %v239 = vsel %vm234, %v219, 0
        %241 = vmatprep.subr.mxu0 0.0
        %v242 = vand.u32 %v200, 4294901760
        %243 = vmatpush1.msra.mxu0 %v242
        %244 = vmatprep.subr.mxu0 0.0
        %v245 = vand.u32 %v201, 4294901760
        %246 = vmatpush1.msra.mxu0 %v245
        %247 = vmatprep.subr.mxu0 0.0
        %248 = vmatpush1.msra.mxu0 0.0
        %249 = vmatprep.subr.mxu0 0.0
        %250 = vmatpush1.msra.mxu0 0.0
        %251 = vmatprep.subr.mxu0 0.0
        %252 = vmatpush1.msra.mxu0 0.0
        %253 = vmatprep.subr.mxu0 0.0
        %254 = vmatpush1.msra.mxu0 0.0
        %255 = vmatprep.subr.mxu0 0.0
        %256 = vmatpush1.msra.mxu0 0.0
        %257 = vmatprep.subr.mxu0 0.0
        %258 = vmatpush1.msra.mxu0 0.0
        %259 = vmatprep.subr.mxu0 0.0
        %260 = vmatpush1.msra.mxu0 0.0
        %261 = vmatprep.subr.mxu0 0.0
        %262 = vmatpush1.msra.mxu0 0.0
        %263 = vmatprep.subr.mxu0 0.0
        %264 = vmatpush1.msra.mxu0 0.0
        %265 = vmatprep.subr.mxu0 0.0
        %266 = vmatpush1.msra.mxu0 0.0
        %267 = vmatprep.subr.mxu0 0.0
        %268 = vmatpush1.msra.mxu0 0.0
        %269 = vmatprep.subr.mxu0 0.0
        %270 = vmatpush1.msra.mxu0 0.0
        %271 = vmatprep.subr.mxu0 0.0
        %272 = vmatpush1.msra.mxu0 0.0
        %273 = vmatprep.subr.mxu0 0.0
        %274 = vmatpush1.msra.mxu0 0.0
        %275 = vmatprep.subr.mxu0 0.0
        %276 = vmatpush1.msra.mxu0 0.0
        %277 = vmatprep.subr.mxu0 0.0
        %278 = vmatpush1.msra.mxu0 0.0
        %279 = vmatprep.subr.mxu0 0.0
        %280 = vmatpush1.msra.mxu0 0.0
        %281 = vmatprep.subr.mxu0 0.0
        %282 = vmatpush1.msra.mxu0 0.0
        %283 = vmatprep.subr.mxu0 0.0
        %284 = vmatpush1.msra.mxu0 0.0
        %285 = vmatprep.subr.mxu0 0.0
        %286 = vmatpush1.msra.mxu0 0.0
        %287 = vmatprep.subr.mxu0 0.0
        %288 = vmatpush1.msra.mxu0 0.0
        %289 = vmatprep.subr.mxu0 0.0
        %290 = vmatpush1.msra.mxu0 0.0
        %291 = vmatprep.subr.mxu0 0.0
        %292 = vmatpush1.msra.mxu0 0.0
        %293 = vmatprep.subr.mxu0 0.0
        %294 = vmatpush1.msra.mxu0 0.0
        %295 = vmatprep.subr.mxu0 0.0
        %296 = vmatpush1.msra.mxu0 0.0
        %297 = vmatprep.subr.mxu0 0.0
        %298 = vmatpush1.msra.mxu0 0.0
        %299 = vmatprep.subr.mxu0 0.0
        %300 = vmatpush1.msra.mxu0 0.0
        %301 = vmatprep.subr.mxu0 0.0
        %302 = vmatpush1.msra.mxu0 0.0
        %303 = vmatprep.subr.mxu0 0.0
        %304 = vmatpush1.msra.mxu0 0.0
        %305 = vmatprep.subr.mxu0 0.0
        %306 = vmatpush1.msra.mxu0 0.0
        %307 = vmatprep.mubr.f32.mxu0 0.0
        %v308 = vand.u32 %v236, 4294901760
        %v309 = vsub.f32 %v236, %v308
        %v310 = vand.u32 %v309, 4294901760
        %v311 = vsub.f32 %v309, %v310
        %v312 = vand.u32 %v311, 4294901760
        %313 = vmatmul.mubr.f32.gmra.mrb[0].mxu0 %v312
        %v314 = vpop.f32.mrb[0].mxu0
        %v315 = vadd.f32 0.0, %v314
        %v316 = vpop.f32.mrb[0].mxu0
        %317 = vmatprep.mubr.f32.mxu0 0.0
        %v318 = vand.u32 %v239, 4294901760
        %v319 = vsub.f32 %v239, %v318
        %v320 = vand.u32 %v319, 4294901760
        %v321 = vsub.f32 %v319, %v320
        %v322 = vand.u32 %v321, 4294901760
        %323 = vmatmul.mubr.f32.gmra.mrb[0].mxu0 %v322
        %v324 = vpop.f32.mrb[0].mxu0
        %v325 = vadd.f32 0.0, %v324
        %v326 = vpop.f32.mrb[0].mxu0
        %327 = vdwg.mxu0
        %328 = vmatprep.subr.mxu0 0.0
        %v329 = vand.u32 %v200, 4294901760
        %v330 = vsub.f32 %v200, %v329
        %v331 = vand.u32 %v330, 4294901760
        %v332 = vsub.f32 %v330, %v331
        %v333 = vand.u32 %v332, 4294901760
        %334 = vmatpush1.msra.mxu0 %v333
        %335 = vmatprep.subr.mxu0 0.0
        %v336 = vand.u32 %v201, 4294901760
        %v337 = vsub.f32 %v201, %v336
        %v338 = vand.u32 %v337, 4294901760
        %v339 = vsub.f32 %v337, %v338
        %v340 = vand.u32 %v339, 4294901760
        %341 = vmatpush1.msra.mxu0 %v340
        %342 = vmatprep.subr.mxu0 0.0
        %343 = vmatpush1.msra.mxu0 0.0
        %344 = vmatprep.subr.mxu0 0.0
        %345 = vmatpush1.msra.mxu0 0.0
        %346 = vmatprep.subr.mxu0 0.0
        %347 = vmatpush1.msra.mxu0 0.0
        %348 = vmatprep.subr.mxu0 0.0
        %349 = vmatpush1.msra.mxu0 0.0
        %350 = vmatprep.subr.mxu0 0.0
        %351 = vmatpush1.msra.mxu0 0.0
        %352 = vmatprep.subr.mxu0 0.0
        %353 = vmatpush1.msra.mxu0 0.0
        %354 = vmatprep.subr.mxu0 0.0
        %355 = vmatpush1.msra.mxu0 0.0
        %356 = vmatprep.subr.mxu0 0.0
        %357 = vmatpush1.msra.mxu0 0.0
        %358 = vmatprep.subr.mxu0 0.0
        %359 = vmatpush1.msra.mxu0 0.0
        %360 = vmatprep.subr.mxu0 0.0
        %361 = vmatpush1.msra.mxu0 0.0
        %362 = vmatprep.subr.mxu0 0.0
        %363 = vmatpush1.msra.mxu0 0.0
        %364 = vmatprep.subr.mxu0 0.0
        %365 = vmatpush1.msra.mxu0 0.0
        %366 = vmatprep.subr.mxu0 0.0
        %367 = vmatpush1.msra.mxu0 0.0
        %368 = vmatprep.subr.mxu0 0.0
        %369 = vmatpush1.msra.mxu0 0.0
        %370 = vmatprep.subr.mxu0 0.0
        %371 = vmatpush1.msra.mxu0 0.0
        %372 = vmatprep.subr.mxu0 0.0
        %373 = vmatpush1.msra.mxu0 0.0
        %374 = vmatprep.subr.mxu0 0.0
        %375 = vmatpush1.msra.mxu0 0.0
        %376 = vmatprep.subr.mxu0 0.0
        %377 = vmatpush1.msra.mxu0 0.0
        %378 = vmatprep.subr.mxu0 0.0
        %379 = vmatpush1.msra.mxu0 0.0
        %380 = vmatprep.subr.mxu0 0.0
        %381 = vmatpush1.msra.mxu0 0.0
        %382 = vmatprep.subr.mxu0 0.0
        %383 = vmatpush1.msra.mxu0 0.0
        %384 = vmatprep.subr.mxu0 0.0
        %385 = vmatpush1.msra.mxu0 0.0
        %386 = vmatprep.subr.mxu0 0.0
        %387 = vmatpush1.msra.mxu0 0.0
        %388 = vmatprep.subr.mxu0 0.0
        %389 = vmatpush1.msra.mxu0 0.0
        %390 = vmatprep.subr.mxu0 0.0
        %391 = vmatpush1.msra.mxu0 0.0
        %392 = vmatprep.subr.mxu0 0.0
        %393 = vmatpush1.msra.mxu0 0.0
        %394 = vmatprep.subr.mxu0 0.0
        %395 = vmatpush1.msra.mxu0 0.0
        %396 = vmatprep.subr.mxu0 0.0
        %397 = vmatpush1.msra.mxu0 0.0
        %398 = vmatprep.subr.mxu0 0.0
        %399 = vmatpush1.msra.mxu0 0.0
        %400 = vmatprep.subr.mxu0 0.0
        %401 = vmatpush1.msra.mxu0 0.0
        %402 = vmatprep.mubr.f32.mxu0 0.0
        %v403 = vand.u32 %v236, 4294901760
        %404 = vmatmul.mubr.f32.gmra.mrb[0].mxu0 %v403
        %v405 = vpop.f32.mrb[0].mxu0
        %v406 = vadd.f32 %v315, %v405
        %v407 = vpop.f32.mrb[0].mxu0
        %408 = vmatprep.mubr.f32.mxu0 0.0
        %v409 = vand.u32 %v239, 4294901760
        %410 = vmatmul.mubr.f32.gmra.mrb[0].mxu0 %v409
        %v411 = vpop.f32.mrb[0].mxu0
        %v412 = vadd.f32 %v325, %v411
        %v413 = vpop.f32.mrb[0].mxu0
        %414 = vdwg.mxu0
        %415 = vmatprep.subr.mxu0 0.0
        %v416 = vand.u32 %v200, 4294901760
        %v417 = vsub.f32 %v200, %v416
        %418 = vmatpush1.msra.mxu0 %v417
        %419 = vmatprep.subr.mxu0 0.0
        %v420 = vand.u32 %v201, 4294901760
        %v421 = vsub.f32 %v201, %v420
        %422 = vmatpush1.msra.mxu0 %v421
        %423 = vmatprep.subr.mxu0 0.0
        %424 = vmatpush1.msra.mxu0 0.0
        %425 = vmatprep.subr.mxu0 0.0
        %426 = vmatpush1.msra.mxu0 0.0
        %427 = vmatprep.subr.mxu0 0.0
        %428 = vmatpush1.msra.mxu0 0.0
        %429 = vmatprep.subr.mxu0 0.0
        %430 = vmatpush1.msra.mxu0 0.0
        %431 = vmatprep.subr.mxu0 0.0
        %432 = vmatpush1.msra.mxu0 0.0
        %433 = vmatprep.subr.mxu0 0.0
        %434 = vmatpush1.msra.mxu0 0.0
        %435 = vmatprep.subr.mxu0 0.0
        %436 = vmatpush1.msra.mxu0 0.0
        %437 = vmatprep.subr.mxu0 0.0
        %438 = vmatpush1.msra.mxu0 0.0
        %439 = vmatprep.subr.mxu0 0.0
        %440 = vmatpush1.msra.mxu0 0.0
        %441 = vmatprep.subr.mxu0 0.0
        %442 = vmatpush1.msra.mxu0 0.0
        %443 = vmatprep.subr.mxu0 0.0
        %444 = vmatpush1.msra.mxu0 0.0
        %445 = vmatprep.subr.mxu0 0.0
        %446 = vmatpush1.msra.mxu0 0.0
        %447 = vmatprep.subr.mxu0 0.0
        %448 = vmatpush1.msra.mxu0 0.0
        %449 = vmatprep.subr.mxu0 0.0
        %450 = vmatpush1.msra.mxu0 0.0
        %451 = vmatprep.subr.mxu0 0.0
        %452 = vmatpush1.msra.mxu0 0.0
        %453 = vmatprep.subr.mxu0 0.0
        %454 = vmatpush1.msra.mxu0 0.0
        %455 = vmatprep.subr.mxu0 0.0
        %456 = vmatpush1.msra.mxu0 0.0
        %457 = vmatprep.subr.mxu0 0.0
        %458 = vmatpush1.msra.mxu0 0.0
        %459 = vmatprep.subr.mxu0 0.0
        %460 = vmatpush1.msra.mxu0 0.0
        %461 = vmatprep.subr.mxu0 0.0
        %462 = vmatpush1.msra.mxu0 0.0
        %463 = vmatprep.subr.mxu0 0.0
        %464 = vmatpush1.msra.mxu0 0.0
        %465 = vmatprep.subr.mxu0 0.0
        %466 = vmatpush1.msra.mxu0 0.0
        %467 = vmatprep.subr.mxu0 0.0
        %468 = vmatpush1.msra.mxu0 0.0
        %469 = vmatprep.subr.mxu0 0.0
        %470 = vmatpush1.msra.mxu0 0.0
        %471 = vmatprep.subr.mxu0 0.0
        %472 = vmatpush1.msra.mxu0 0.0
        %473 = vmatprep.subr.mxu0 0.0
        %474 = vmatpush1.msra.mxu0 0.0
        %475 = vmatprep.subr.mxu0 0.0
        %476 = vmatpush1.msra.mxu0 0.0
        %477 = vmatprep.subr.mxu0 0.0
        %478 = vmatpush1.msra.mxu0 0.0
        %479 = vmatprep.subr.mxu0 0.0
        %480 = vmatpush1.msra.mxu0 0.0
        %481 = vmatprep.subr.mxu0 0.0
        %482 = vmatpush1.msra.mxu0 0.0
        %483 = vmatprep.mubr.f32.mxu0 0.0
        %v484 = vand.u32 %v236, 4294901760
        %v485 = vsub.f32 %v236, %v484
        %486 = vmatmul.mubr.f32.gmra.mrb[0].mxu0 %v485
        %v487 = vpop.f32.mrb[0].mxu0
        %v488 = vadd.f32 %v406, %v487
        %v489 = vpop.f32.mrb[0].mxu0
        %490 = vmatprep.mubr.f32.mxu0 0.0
        %v491 = vand.u32 %v239, 4294901760
        %v492 = vsub.f32 %v239, %v491
        %493 = vmatmul.mubr.f32.gmra.mrb[0].mxu0 %v492
        %v494 = vpop.f32.mrb[0].mxu0
        %v495 = vadd.f32 %v412, %v494
        %v496 = vpop.f32.mrb[0].mxu0
        %497 = vdwg.mxu0
        %498 = vmatprep.subr.mxu0 0.0
        %v499 = vand.u32 %v200, 4294901760
        %500 = vmatpush1.msra.mxu0 %v499
        %501 = vmatprep.subr.mxu0 0.0
        %v502 = vand.u32 %v201, 4294901760
        %503 = vmatpush1.msra.mxu0 %v502
        %504 = vmatprep.subr.mxu0 0.0
        %505 = vmatpush1.msra.mxu0 0.0
        %506 = vmatprep.subr.mxu0 0.0
        %507 = vmatpush1.msra.mxu0 0.0
        %508 = vmatprep.subr.mxu0 0.0
        %509 = vmatpush1.msra.mxu0 0.0
        %510 = vmatprep.subr.mxu0 0.0
        %511 = vmatpush1.msra.mxu0 0.0
        %512 = vmatprep.subr.mxu0 0.0
        %513 = vmatpush1.msra.mxu0 0.0
        %514 = vmatprep.subr.mxu0 0.0
        %515 = vmatpush1.msra.mxu0 0.0
        %516 = vmatprep.subr.mxu0 0.0
        %517 = vmatpush1.msra.mxu0 0.0
        %518 = vmatprep.subr.mxu0 0.0
        %519 = vmatpush1.msra.mxu0 0.0
        %520 = vmatprep.subr.mxu0 0.0
        %521 = vmatpush1.msra.mxu0 0.0
        %522 = vmatprep.subr.mxu0 0.0
        %523 = vmatpush1.msra.mxu0 0.0
        %524 = vmatprep.subr.mxu0 0.0
        %525 = vmatpush1.msra.mxu0 0.0
        %526 = vmatprep.subr.mxu0 0.0
        %527 = vmatpush1.msra.mxu0 0.0
        %528 = vmatprep.subr.mxu0 0.0
        %529 = vmatpush1.msra.mxu0 0.0
        %530 = vmatprep.subr.mxu0 0.0
        %531 = vmatpush1.msra.mxu0 0.0
        %532 = vmatprep.subr.mxu0 0.0
        %533 = vmatpush1.msra.mxu0 0.0
        %534 = vmatprep.subr.mxu0 0.0
        %535 = vmatpush1.msra.mxu0 0.0
        %536 = vmatprep.subr.mxu0 0.0
        %537 = vmatpush1.msra.mxu0 0.0
        %538 = vmatprep.subr.mxu0 0.0
        %539 = vmatpush1.msra.mxu0 0.0
        %540 = vmatprep.subr.mxu0 0.0
        %541 = vmatpush1.msra.mxu0 0.0
        %542 = vmatprep.subr.mxu0 0.0
        %543 = vmatpush1.msra.mxu0 0.0
        %544 = vmatprep.subr.mxu0 0.0
        %545 = vmatpush1.msra.mxu0 0.0
        %546 = vmatprep.subr.mxu0 0.0
        %547 = vmatpush1.msra.mxu0 0.0
        %548 = vmatprep.subr.mxu0 0.0
        %549 = vmatpush1.msra.mxu0 0.0
        %550 = vmatprep.subr.mxu0 0.0
        %551 = vmatpush1.msra.mxu0 0.0
        %552 = vmatprep.subr.mxu0 0.0
        %553 = vmatpush1.msra.mxu0 0.0
        %554 = vmatprep.subr.mxu0 0.0
        %555 = vmatpush1.msra.mxu0 0.0
        %556 = vmatprep.subr.mxu0 0.0
        %557 = vmatpush1.msra.mxu0 0.0
        %558 = vmatprep.subr.mxu0 0.0
        %559 = vmatpush1.msra.mxu0 0.0
        %560 = vmatprep.subr.mxu0 0.0
        %561 = vmatpush1.msra.mxu0 0.0
        %562 = vmatprep.subr.mxu0 0.0
        %563 = vmatpush1.msra.mxu0 0.0
        %564 = vmatprep.mubr.f32.mxu0 0.0
        %v565 = vand.u32 %v236, 4294901760
        %v566 = vsub.f32 %v236, %v565
        %v567 = vand.u32 %v566, 4294901760
        %568 = vmatmul.mubr.f32.gmra.mrb[0].mxu0 %v567
        %v569 = vpop.f32.mrb[0].mxu0
        %v570 = vadd.f32 %v488, %v569
        %v571 = vpop.f32.mrb[0].mxu0
        %572 = vmatprep.mubr.f32.mxu0 0.0
        %v573 = vand.u32 %v239, 4294901760
        %v574 = vsub.f32 %v239, %v573
        %v575 = vand.u32 %v574, 4294901760
        %576 = vmatmul.mubr.f32.gmra.mrb[0].mxu0 %v575
        %v577 = vpop.f32.mrb[0].mxu0
        %v578 = vadd.f32 %v495, %v577
        %v579 = vpop.f32.mrb[0].mxu0
        %580 = vdwg.mxu0
        %581 = vmatprep.subr.mxu0 0.0
        %v582 = vand.u32 %v200, 4294901760
        %v583 = vsub.f32 %v200, %v582
        %v584 = vand.u32 %v583, 4294901760
        %585 = vmatpush1.msra.mxu0 %v584
        %586 = vmatprep.subr.mxu0 0.0
        %v587 = vand.u32 %v201, 4294901760
        %v588 = vsub.f32 %v201, %v587
        %v589 = vand.u32 %v588, 4294901760
        %590 = vmatpush1.msra.mxu0 %v589
        %591 = vmatprep.subr.mxu0 0.0
        %592 = vmatpush1.msra.mxu0 0.0
        %593 = vmatprep.subr.mxu0 0.0
        %594 = vmatpush1.msra.mxu0 0.0
        %595 = vmatprep.subr.mxu0 0.0
        %596 = vmatpush1.msra.mxu0 0.0
        %597 = vmatprep.subr.mxu0 0.0
        %598 = vmatpush1.msra.mxu0 0.0
        %599 = vmatprep.subr.mxu0 0.0
        %600 = vmatpush1.msra.mxu0 0.0
        %601 = vmatprep.subr.mxu0 0.0
        %602 = vmatpush1.msra.mxu0 0.0
        %603 = vmatprep.subr.mxu0 0.0
        %604 = vmatpush1.msra.mxu0 0.0
        %605 = vmatprep.subr.mxu0 0.0
        %606 = vmatpush1.msra.mxu0 0.0
        %607 = vmatprep.subr.mxu0 0.0
        %608 = vmatpush1.msra.mxu0 0.0
        %609 = vmatprep.subr.mxu0 0.0
        %610 = vmatpush1.msra.mxu0 0.0
        %611 = vmatprep.subr.mxu0 0.0
        %612 = vmatpush1.msra.mxu0 0.0
        %613 = vmatprep.subr.mxu0 0.0
        %614 = vmatpush1.msra.mxu0 0.0
        %615 = vmatprep.subr.mxu0 0.0
        %616 = vmatpush1.msra.mxu0 0.0
        %617 = vmatprep.subr.mxu0 0.0
        %618 = vmatpush1.msra.mxu0 0.0
        %619 = vmatprep.subr.mxu0 0.0
        %620 = vmatpush1.msra.mxu0 0.0
        %621 = vmatprep.subr.mxu0 0.0
        %622 = vmatpush1.msra.mxu0 0.0
        %623 = vmatprep.subr.mxu0 0.0
        %624 = vmatpush1.msra.mxu0 0.0
        %625 = vmatprep.subr.mxu0 0.0
        %626 = vmatpush1.msra.mxu0 0.0
        %627 = vmatprep.subr.mxu0 0.0
        %628 = vmatpush1.msra.mxu0 0.0
        %629 = vmatprep.subr.mxu0 0.0
        %630 = vmatpush1.msra.mxu0 0.0
        %631 = vmatprep.subr.mxu0 0.0
        %632 = vmatpush1.msra.mxu0 0.0
        %633 = vmatprep.subr.mxu0 0.0
        %634 = vmatpush1.msra.mxu0 0.0
        %635 = vmatprep.subr.mxu0 0.0
        %636 = vmatpush1.msra.mxu0 0.0
        %637 = vmatprep.subr.mxu0 0.0
        %638 = vmatpush1.msra.mxu0 0.0
        %639 = vmatprep.subr.mxu0 0.0
        %640 = vmatpush1.msra.mxu0 0.0
        %641 = vmatprep.subr.mxu0 0.0
        %642 = vmatpush1.msra.mxu0 0.0
        %643 = vmatprep.subr.mxu0 0.0
        %644 = vmatpush1.msra.mxu0 0.0
        %645 = vmatprep.subr.mxu0 0.0
        %646 = vmatpush1.msra.mxu0 0.0
        %647 = vmatprep.subr.mxu0 0.0
        %648 = vmatpush1.msra.mxu0 0.0
        %649 = vmatprep.subr.mxu0 0.0
        %650 = vmatpush1.msra.mxu0 0.0
        %651 = vmatprep.mubr.f32.mxu0 0.0
        %v652 = vand.u32 %v236, 4294901760
        %653 = vmatmul.mubr.f32.gmra.mrb[0].mxu0 %v652
        %v654 = vpop.f32.mrb[0].mxu0
        %v655 = vadd.f32 %v570, %v654
        %v656 = vpop.f32.mrb[0].mxu0
        %657 = vmatprep.mubr.f32.mxu0 0.0
        %v658 = vand.u32 %v239, 4294901760
        %659 = vmatmul.mubr.f32.gmra.mrb[0].mxu0 %v658
        %v660 = vpop.f32.mrb[0].mxu0
        %v661 = vadd.f32 %v578, %v660
        %v662 = vpop.f32.mrb[0].mxu0
        %663 = vdwg.mxu0
        %664 = vmatprep.subr.mxu0 0.0
        %v665 = vand.u32 %v200, 4294901760
        %666 = vmatpush1.msra.mxu0 %v665
        %667 = vmatprep.subr.mxu0 0.0
        %v668 = vand.u32 %v201, 4294901760
        %669 = vmatpush1.msra.mxu0 %v668
        %670 = vmatprep.subr.mxu0 0.0
        %671 = vmatpush1.msra.mxu0 0.0
        %672 = vmatprep.subr.mxu0 0.0
        %673 = vmatpush1.msra.mxu0 0.0
        %674 = vmatprep.subr.mxu0 0.0
        %675 = vmatpush1.msra.mxu0 0.0
        %676 = vmatprep.subr.mxu0 0.0
        %677 = vmatpush1.msra.mxu0 0.0
        %678 = vmatprep.subr.mxu0 0.0
        %679 = vmatpush1.msra.mxu0 0.0
        %680 = vmatprep.subr.mxu0 0.0
        %681 = vmatpush1.msra.mxu0 0.0
        %682 = vmatprep.subr.mxu0 0.0
        %683 = vmatpush1.msra.mxu0 0.0
        %684 = vmatprep.subr.mxu0 0.0
        %685 = vmatpush1.msra.mxu0 0.0
        %686 = vmatprep.subr.mxu0 0.0
        %687 = vmatpush1.msra.mxu0 0.0
        %688 = vmatprep.subr.mxu0 0.0
        %689 = vmatpush1.msra.mxu0 0.0
        %690 = vmatprep.subr.mxu0 0.0
        %691 = vmatpush1.msra.mxu0 0.0
        %692 = vmatprep.subr.mxu0 0.0
        %693 = vmatpush1.msra.mxu0 0.0
        %694 = vmatprep.subr.mxu0 0.0
        %695 = vmatpush1.msra.mxu0 0.0
        %696 = vmatprep.subr.mxu0 0.0
        %697 = vmatpush1.msra.mxu0 0.0
        %698 = vmatprep.subr.mxu0 0.0
        %699 = vmatpush1.msra.mxu0 0.0
        %700 = vmatprep.subr.mxu0 0.0
        %701 = vmatpush1.msra.mxu0 0.0
        %702 = vmatprep.subr.mxu0 0.0
        %703 = vmatpush1.msra.mxu0 0.0
        %704 = vmatprep.subr.mxu0 0.0
        %705 = vmatpush1.msra.mxu0 0.0
        %706 = vmatprep.subr.mxu0 0.0
        %707 = vmatpush1.msra.mxu0 0.0
        %708 = vmatprep.subr.mxu0 0.0
        %709 = vmatpush1.msra.mxu0 0.0
        %710 = vmatprep.subr.mxu0 0.0
        %711 = vmatpush1.msra.mxu0 0.0
        %712 = vmatprep.subr.mxu0 0.0
        %713 = vmatpush1.msra.mxu0 0.0
        %714 = vmatprep.subr.mxu0 0.0
        %715 = vmatpush1.msra.mxu0 0.0
        %716 = vmatprep.subr.mxu0 0.0
        %717 = vmatpush1.msra.mxu0 0.0
        %718 = vmatprep.subr.mxu0 0.0
        %719 = vmatpush1.msra.mxu0 0.0
        %720 = vmatprep.subr.mxu0 0.0
        %721 = vmatpush1.msra.mxu0 0.0
        %722 = vmatprep.subr.mxu0 0.0
        %723 = vmatpush1.msra.mxu0 0.0
        %724 = vmatprep.subr.mxu0 0.0
        %725 = vmatpush1.msra.mxu0 0.0
        %726 = vmatprep.subr.mxu0 0.0
        %727 = vmatpush1.msra.mxu0 0.0
        %728 = vmatprep.subr.mxu0 0.0
        %729 = vmatpush1.msra.mxu0 0.0
        %730 = vmatprep.mubr.f32.mxu0 0.0
        %v731 = vand.u32 %v236, 4294901760
        %732 = vmatmul.mubr.f32.gmra.mrb[0].mxu0 %v731
        %v733 = vpop.f32.mrb[0].mxu0
        %v734 = vadd.f32 %v655, %v733
        %v735 = vpop.f32.mrb[0].mxu0
        %736 = vmatprep.mubr.f32.mxu0 0.0
        %v737 = vand.u32 %v239, 4294901760
        %738 = vmatmul.mubr.f32.gmra.mrb[0].mxu0 %v737
        %v739 = vpop.f32.mrb[0].mxu0
        %v740 = vadd.f32 %v661, %v739
        %v741 = vpop.f32.mrb[0].mxu0
        %742 = vdwg.mxu0
        %vm743 = vcmask 523264
        %744 = vst.msk [vmem:[%s197] sm:$0xff] %vm743, %v734
        %745 = vst.msk [vmem:[%s197 + $0x8] sm:$0xff] %vm743, %v740
        %746 = vmatprep.subr.mxu0 0.0
        %v747 = vand.u32 %v734, 4294901760
        %748 = vmatpush1.msra.mxu0 %v747
        %749 = vmatprep.subr.mxu0 0.0
        %v750 = vand.u32 %v740, 4294901760
        %751 = vmatpush1.msra.mxu0 %v750
        %752 = vmatprep.subr.mxu0 0.0
        %753 = vmatpush1.msra.mxu0 0.0
        %754 = vmatprep.subr.mxu0 0.0
        %755 = vmatpush1.msra.mxu0 0.0
        %756 = vmatprep.subr.mxu0 0.0
        %757 = vmatpush1.msra.mxu0 0.0
        %758 = vmatprep.subr.mxu0 0.0
        %759 = vmatpush1.msra.mxu0 0.0
        %760 = vmatprep.subr.mxu0 0.0
        %761 = vmatpush1.msra.mxu0 0.0
        %762 = vmatprep.subr.mxu0 0.0
        %763 = vmatpush1.msra.mxu0 0.0
        %764 = vmatprep.subr.mxu0 0.0
        %765 = vmatpush1.msra.mxu0 0.0
        %766 = vmatprep.subr.mxu0 0.0
        %767 = vmatpush1.msra.mxu0 0.0
        %768 = vmatprep.subr.mxu0 0.0
        %769 = vmatpush1.msra.mxu0 0.0
        %770 = vmatprep.subr.mxu0 0.0
        %771 = vmatpush1.msra.mxu0 0.0
        %772 = vmatprep.subr.mxu0 0.0
        %773 = vmatpush1.msra.mxu0 0.0
        %774 = vmatprep.subr.mxu0 0.0
        %775 = vmatpush1.msra.mxu0 0.0
        %776 = vmatprep.subr.mxu0 0.0
        %777 = vmatpush1.msra.mxu0 0.0
        %778 = vmatprep.subr.mxu0 0.0
        %779 = vmatpush1.msra.mxu0 0.0
        %780 = vmatprep.subr.mxu0 0.0
        %781 = vmatpush1.msra.mxu0 0.0
        %782 = vmatprep.subr.mxu0 0.0
        %783 = vmatpush1.msra.mxu0 0.0
        %784 = vmatprep.subr.mxu0 0.0
        %785 = vmatpush1.msra.mxu0 0.0
        %786 = vmatprep.subr.mxu0 0.0
        %787 = vmatpush1.msra.mxu0 0.0
        %788 = vmatprep.subr.mxu0 0.0
        %789 = vmatpush1.msra.mxu0 0.0
        %790 = vmatprep.subr.mxu0 0.0
        %791 = vmatpush1.msra.mxu0 0.0
        %792 = vmatprep.subr.mxu0 0.0
        %793 = vmatpush1.msra.mxu0 0.0
        %794 = vmatprep.subr.mxu0 0.0
        %795 = vmatpush1.msra.mxu0 0.0
        %796 = vmatprep.subr.mxu0 0.0
        %797 = vmatpush1.msra.mxu0 0.0
        %798 = vmatprep.subr.mxu0 0.0
        %799 = vmatpush1.msra.mxu0 0.0
        %800 = vmatprep.subr.mxu0 0.0
        %801 = vmatpush1.msra.mxu0 0.0
        %802 = vmatprep.subr.mxu0 0.0
        %803 = vmatpush1.msra.mxu0 0.0
        %804 = vmatprep.subr.mxu0 0.0
        %805 = vmatpush1.msra.mxu0 0.0
        %806 = vmatprep.subr.mxu0 0.0
        %807 = vmatpush1.msra.mxu0 0.0
        %808 = vmatprep.subr.mxu0 0.0
        %809 = vmatpush1.msra.mxu0 0.0
        %810 = vmatprep.subr.mxu0 0.0
        %811 = vmatpush1.msra.mxu0 0.0
        %812 = vmatprep.mubr.f32.mxu0 0.0
        %v813 = vand.u32 %v236, 4294901760
        %v814 = vsub.f32 %v236, %v813
        %v815 = vand.u32 %v814, 4294901760
        %v816 = vsub.f32 %v814, %v815
        %v817 = vand.u32 %v816, 4294901760
        %818 = vmatmul.mubr.f32.gmra.mrb[0].mxu0 %v817
        %v819 = vpop.f32.mrb[0].mxu0
        %v820 = vadd.f32 0.0, %v819
        %v821 = vpop.f32.mrb[0].mxu0
        %822 = vmatprep.mubr.f32.mxu0 0.0
        %v823 = vand.u32 %v239, 4294901760
        %v824 = vsub.f32 %v239, %v823
        %v825 = vand.u32 %v824, 4294901760
        %v826 = vsub.f32 %v824, %v825
        %v827 = vand.u32 %v826, 4294901760
        %828 = vmatmul.mubr.f32.gmra.mrb[0].mxu0 %v827
        %v829 = vpop.f32.mrb[0].mxu0
        %v830 = vadd.f32 0.0, %v829
        %v831 = vpop.f32.mrb[0].mxu0
        %832 = vdwg.mxu0
        %833 = vmatprep.subr.mxu0 0.0
        %v834 = vand.u32 %v734, 4294901760
        %v835 = vsub.f32 %v734, %v834
        %v836 = vand.u32 %v835, 4294901760
        %v837 = vsub.f32 %v835, %v836
        %v838 = vand.u32 %v837, 4294901760
        %839 = vmatpush1.msra.mxu0 %v838
        %840 = vmatprep.subr.mxu0 0.0
        %v841 = vand.u32 %v740, 4294901760
        %v842 = vsub.f32 %v740, %v841
        %v843 = vand.u32 %v842, 4294901760
        %v844 = vsub.f32 %v842, %v843
        %v845 = vand.u32 %v844, 4294901760
        %846 = vmatpush1.msra.mxu0 %v845
        %847 = vmatprep.subr.mxu0 0.0
        %848 = vmatpush1.msra.mxu0 0.0
        %849 = vmatprep.subr.mxu0 0.0
        %850 = vmatpush1.msra.mxu0 0.0
        %851 = vmatprep.subr.mxu0 0.0
        %852 = vmatpush1.msra.mxu0 0.0
        %853 = vmatprep.subr.mxu0 0.0
        %854 = vmatpush1.msra.mxu0 0.0
        %855 = vmatprep.subr.mxu0 0.0
        %856 = vmatpush1.msra.mxu0 0.0
        %857 = vmatprep.subr.mxu0 0.0
        %858 = vmatpush1.msra.mxu0 0.0
        %859 = vmatprep.subr.mxu0 0.0
        %860 = vmatpush1.msra.mxu0 0.0
        %861 = vmatprep.subr.mxu0 0.0
        %862 = vmatpush1.msra.mxu0 0.0
        %863 = vmatprep.subr.mxu0 0.0
        %864 = vmatpush1.msra.mxu0 0.0
        %865 = vmatprep.subr.mxu0 0.0
        %866 = vmatpush1.msra.mxu0 0.0
        %867 = vmatprep.subr.mxu0 0.0
        %868 = vmatpush1.msra.mxu0 0.0
        %869 = vmatprep.subr.mxu0 0.0
        %870 = vmatpush1.msra.mxu0 0.0
        %871 = vmatprep.subr.mxu0 0.0
        %872 = vmatpush1.msra.mxu0 0.0
        %873 = vmatprep.subr.mxu0 0.0
        %874 = vmatpush1.msra.mxu0 0.0
        %875 = vmatprep.subr.mxu0 0.0
        %876 = vmatpush1.msra.mxu0 0.0
        %877 = vmatprep.subr.mxu0 0.0
        %878 = vmatpush1.msra.mxu0 0.0
        %879 = vmatprep.subr.mxu0 0.0
        %880 = vmatpush1.msra.mxu0 0.0
        %881 = vmatprep.subr.mxu0 0.0
        %882 = vmatpush1.msra.mxu0 0.0
        %883 = vmatprep.subr.mxu0 0.0
        %884 = vmatpush1.msra.mxu0 0.0
        %885 = vmatprep.subr.mxu0 0.0
        %886 = vmatpush1.msra.mxu0 0.0
        %887 = vmatprep.subr.mxu0 0.0
        %888 = vmatpush1.msra.mxu0 0.0
        %889 = vmatprep.subr.mxu0 0.0
        %890 = vmatpush1.msra.mxu0 0.0
        %891 = vmatprep.subr.mxu0 0.0
        %892 = vmatpush1.msra.mxu0 0.0
        %893 = vmatprep.subr.mxu0 0.0
        %894 = vmatpush1.msra.mxu0 0.0
        %895 = vmatprep.subr.mxu0 0.0
        %896 = vmatpush1.msra.mxu0 0.0
        %897 = vmatprep.subr.mxu0 0.0
        %898 = vmatpush1.msra.mxu0 0.0
        %899 = vmatprep.subr.mxu0 0.0
        %900 = vmatpush1.msra.mxu0 0.0
        %901 = vmatprep.subr.mxu0 0.0
        %902 = vmatpush1.msra.mxu0 0.0
        %903 = vmatprep.subr.mxu0 0.0
        %904 = vmatpush1.msra.mxu0 0.0
        %905 = vmatprep.subr.mxu0 0.0
        %906 = vmatpush1.msra.mxu0 0.0
        %907 = vmatprep.mubr.f32.mxu0 0.0
        %v908 = vand.u32 %v236, 4294901760
        %909 = vmatmul.mubr.f32.gmra.mrb[0].mxu0 %v908
        %v910 = vpop.f32.mrb[0].mxu0
        %v911 = vadd.f32 %v820, %v910
        %v912 = vpop.f32.mrb[0].mxu0
        %913 = vmatprep.mubr.f32.mxu0 0.0
        %v914 = vand.u32 %v239, 4294901760
        %915 = vmatmul.mubr.f32.gmra.mrb[0].mxu0 %v914
        %v916 = vpop.f32.mrb[0].mxu0
        %v917 = vadd.f32 %v830, %v916
        %v918 = vpop.f32.mrb[0].mxu0
        %919 = vdwg.mxu0
        %920 = vmatprep.subr.mxu0 0.0
        %v921 = vand.u32 %v734, 4294901760
        %v922 = vsub.f32 %v734, %v921
        %923 = vmatpush1.msra.mxu0 %v922
        %924 = vmatprep.subr.mxu0 0.0
        %v925 = vand.u32 %v740, 4294901760
        %v926 = vsub.f32 %v740, %v925
        %927 = vmatpush1.msra.mxu0 %v926
        %928 = vmatprep.subr.mxu0 0.0
        %929 = vmatpush1.msra.mxu0 0.0
        %930 = vmatprep.subr.mxu0 0.0
        %931 = vmatpush1.msra.mxu0 0.0
        %932 = vmatprep.subr.mxu0 0.0
        %933 = vmatpush1.msra.mxu0 0.0
        %934 = vmatprep.subr.mxu0 0.0
        %935 = vmatpush1.msra.mxu0 0.0
        %936 = vmatprep.subr.mxu0 0.0
        %937 = vmatpush1.msra.mxu0 0.0
        %938 = vmatprep.subr.mxu0 0.0
        %939 = vmatpush1.msra.mxu0 0.0
        %940 = vmatprep.subr.mxu0 0.0
        %941 = vmatpush1.msra.mxu0 0.0
        %942 = vmatprep.subr.mxu0 0.0
        %943 = vmatpush1.msra.mxu0 0.0
        %944 = vmatprep.subr.mxu0 0.0
        %945 = vmatpush1.msra.mxu0 0.0
        %946 = vmatprep.subr.mxu0 0.0
        %947 = vmatpush1.msra.mxu0 0.0
        %948 = vmatprep.subr.mxu0 0.0
        %949 = vmatpush1.msra.mxu0 0.0
        %950 = vmatprep.subr.mxu0 0.0
        %951 = vmatpush1.msra.mxu0 0.0
        %952 = vmatprep.subr.mxu0 0.0
        %953 = vmatpush1.msra.mxu0 0.0
        %954 = vmatprep.subr.mxu0 0.0
        %955 = vmatpush1.msra.mxu0 0.0
        %956 = vmatprep.subr.mxu0 0.0
        %957 = vmatpush1.msra.mxu0 0.0
        %958 = vmatprep.subr.mxu0 0.0
        %959 = vmatpush1.msra.mxu0 0.0
        %960 = vmatprep.subr.mxu0 0.0
        %961 = vmatpush1.msra.mxu0 0.0
        %962 = vmatprep.subr.mxu0 0.0
        %963 = vmatpush1.msra.mxu0 0.0
        %964 = vmatprep.subr.mxu0 0.0
        %965 = vmatpush1.msra.mxu0 0.0
        %966 = vmatprep.subr.mxu0 0.0
        %967 = vmatpush1.msra.mxu0 0.0
        %968 = vmatprep.subr.mxu0 0.0
        %969 = vmatpush1.msra.mxu0 0.0
        %970 = vmatprep.subr.mxu0 0.0
        %971 = vmatpush1.msra.mxu0 0.0
        %972 = vmatprep.subr.mxu0 0.0
        %973 = vmatpush1.msra.mxu0 0.0
        %974 = vmatprep.subr.mxu0 0.0
        %975 = vmatpush1.msra.mxu0 0.0
        %976 = vmatprep.subr.mxu0 0.0
        %977 = vmatpush1.msra.mxu0 0.0
        %978 = vmatprep.subr.mxu0 0.0
        %979 = vmatpush1.msra.mxu0 0.0
        %980 = vmatprep.subr.mxu0 0.0
        %981 = vmatpush1.msra.mxu0 0.0
        %982 = vmatprep.subr.mxu0 0.0
        %983 = vmatpush1.msra.mxu0 0.0
        %984 = vmatprep.subr.mxu0 0.0
        %985 = vmatpush1.msra.mxu0 0.0
        %986 = vmatprep.subr.mxu0 0.0
        %987 = vmatpush1.msra.mxu0 0.0
        %988 = vmatprep.mubr.f32.mxu0 0.0
        %v989 = vand.u32 %v236, 4294901760
        %v990 = vsub.f32 %v236, %v989
        %991 = vmatmul.mubr.f32.gmra.mrb[0].mxu0 %v990
        %v992 = vpop.f32.mrb[0].mxu0
        %v993 = vadd.f32 %v911, %v992
        %v994 = vpop.f32.mrb[0].mxu0
        %995 = vmatprep.mubr.f32.mxu0 0.0
        %v996 = vand.u32 %v239, 4294901760
        %v997 = vsub.f32 %v239, %v996
        %998 = vmatmul.mubr.f32.gmra.mrb[0].mxu0 %v997
        %v999 = vpop.f32.mrb[0].mxu0
        %v1000 = vadd.f32 %v917, %v999
        %v1001 = vpop.f32.mrb[0].mxu0
        %1002 = vdwg.mxu0
        %1003 = vmatprep.subr.mxu0 0.0
        %v1004 = vand.u32 %v734, 4294901760
        %1005 = vmatpush1.msra.mxu0 %v1004
        %1006 = vmatprep.subr.mxu0 0.0
        %v1007 = vand.u32 %v740, 4294901760
        %1008 = vmatpush1.msra.mxu0 %v1007
        %1009 = vmatprep.subr.mxu0 0.0
        %1010 = vmatpush1.msra.mxu0 0.0
        %1011 = vmatprep.subr.mxu0 0.0
        %1012 = vmatpush1.msra.mxu0 0.0
        %1013 = vmatprep.subr.mxu0 0.0
        %1014 = vmatpush1.msra.mxu0 0.0
        %1015 = vmatprep.subr.mxu0 0.0
        %1016 = vmatpush1.msra.mxu0 0.0
        %1017 = vmatprep.subr.mxu0 0.0
        %1018 = vmatpush1.msra.mxu0 0.0
        %1019 = vmatprep.subr.mxu0 0.0
        %1020 = vmatpush1.msra.mxu0 0.0
        %1021 = vmatprep.subr.mxu0 0.0
        %1022 = vmatpush1.msra.mxu0 0.0
        %1023 = vmatprep.subr.mxu0 0.0
        %1024 = vmatpush1.msra.mxu0 0.0
        %1025 = vmatprep.subr.mxu0 0.0
        %1026 = vmatpush1.msra.mxu0 0.0
        %1027 = vmatprep.subr.mxu0 0.0
        %1028 = vmatpush1.msra.mxu0 0.0
        %1029 = vmatprep.subr.mxu0 0.0
        %1030 = vmatpush1.msra.mxu0 0.0
        %1031 = vmatprep.subr.mxu0 0.0
        %1032 = vmatpush1.msra.mxu0 0.0
        %1033 = vmatprep.subr.mxu0 0.0
        %1034 = vmatpush1.msra.mxu0 0.0
        %1035 = vmatprep.subr.mxu0 0.0
        %1036 = vmatpush1.msra.mxu0 0.0
        %1037 = vmatprep.subr.mxu0 0.0
        %1038 = vmatpush1.msra.mxu0 0.0
        %1039 = vmatprep.subr.mxu0 0.0
        %1040 = vmatpush1.msra.mxu0 0.0
        %1041 = vmatprep.subr.mxu0 0.0
        %1042 = vmatpush1.msra.mxu0 0.0
        %1043 = vmatprep.subr.mxu0 0.0
        %1044 = vmatpush1.msra.mxu0 0.0
        %1045 = vmatprep.subr.mxu0 0.0
        %1046 = vmatpush1.msra.mxu0 0.0
        %1047 = vmatprep.subr.mxu0 0.0
        %1048 = vmatpush1.msra.mxu0 0.0
        %1049 = vmatprep.subr.mxu0 0.0
        %1050 = vmatpush1.msra.mxu0 0.0
        %1051 = vmatprep.subr.mxu0 0.0
        %1052 = vmatpush1.msra.mxu0 0.0
        %1053 = vmatprep.subr.mxu0 0.0
        %1054 = vmatpush1.msra.mxu0 0.0
        %1055 = vmatprep.subr.mxu0 0.0
        %1056 = vmatpush1.msra.mxu0 0.0
        %1057 = vmatprep.subr.mxu0 0.0
        %1058 = vmatpush1.msra.mxu0 0.0
        %1059 = vmatprep.subr.mxu0 0.0
        %1060 = vmatpush1.msra.mxu0 0.0
        %1061 = vmatprep.subr.mxu0 0.0
        %1062 = vmatpush1.msra.mxu0 0.0
        %1063 = vmatprep.subr.mxu0 0.0
        %1064 = vmatpush1.msra.mxu0 0.0
        %1065 = vmatprep.subr.mxu0 0.0
        %1066 = vmatpush1.msra.mxu0 0.0
        %1067 = vmatprep.subr.mxu0 0.0
        %1068 = vmatpush1.msra.mxu0 0.0
        %1069 = vmatprep.mubr.f32.mxu0 0.0
        %v1070 = vand.u32 %v236, 4294901760
        %v1071 = vsub.f32 %v236, %v1070
        %v1072 = vand.u32 %v1071, 4294901760
        %1073 = vmatmul.mubr.f32.gmra.mrb[0].mxu0 %v1072
        %v1074 = vpop.f32.mrb[0].mxu0
        %v1075 = vadd.f32 %v993, %v1074
        %v1076 = vpop.f32.mrb[0].mxu0
        %1077 = vmatprep.mubr.f32.mxu0 0.0
        %v1078 = vand.u32 %v239, 4294901760
        %v1079 = vsub.f32 %v239, %v1078
        %v1080 = vand.u32 %v1079, 4294901760
        %1081 = vmatmul.mubr.f32.gmra.mrb[0].mxu0 %v1080
        %v1082 = vpop.f32.mrb[0].mxu0
        %v1083 = vadd.f32 %v1000, %v1082
        %v1084 = vpop.f32.mrb[0].mxu0
        %1085 = vdwg.mxu0
        %1086 = vmatprep.subr.mxu0 0.0
        %v1087 = vand.u32 %v734, 4294901760
        %v1088 = vsub.f32 %v734, %v1087
        %v1089 = vand.u32 %v1088, 4294901760
        %1090 = vmatpush1.msra.mxu0 %v1089
        %1091 = vmatprep.subr.mxu0 0.0
        %v1092 = vand.u32 %v740, 4294901760
        %v1093 = vsub.f32 %v740, %v1092
        %v1094 = vand.u32 %v1093, 4294901760
        %1095 = vmatpush1.msra.mxu0 %v1094
        %1096 = vmatprep.subr.mxu0 0.0
        %1097 = vmatpush1.msra.mxu0 0.0
        %1098 = vmatprep.subr.mxu0 0.0
        %1099 = vmatpush1.msra.mxu0 0.0
        %1100 = vmatprep.subr.mxu0 0.0
        %1101 = vmatpush1.msra.mxu0 0.0
        %1102 = vmatprep.subr.mxu0 0.0
        %1103 = vmatpush1.msra.mxu0 0.0
        %1104 = vmatprep.subr.mxu0 0.0
        %1105 = vmatpush1.msra.mxu0 0.0
        %1106 = vmatprep.subr.mxu0 0.0
        %1107 = vmatpush1.msra.mxu0 0.0
        %1108 = vmatprep.subr.mxu0 0.0
        %1109 = vmatpush1.msra.mxu0 0.0
        %1110 = vmatprep.subr.mxu0 0.0
        %1111 = vmatpush1.msra.mxu0 0.0
        %1112 = vmatprep.subr.mxu0 0.0
        %1113 = vmatpush1.msra.mxu0 0.0
        %1114 = vmatprep.subr.mxu0 0.0
        %1115 = vmatpush1.msra.mxu0 0.0
        %1116 = vmatprep.subr.mxu0 0.0
        %1117 = vmatpush1.msra.mxu0 0.0
        %1118 = vmatprep.subr.mxu0 0.0
        %1119 = vmatpush1.msra.mxu0 0.0
        %1120 = vmatprep.subr.mxu0 0.0
        %1121 = vmatpush1.msra.mxu0 0.0
        %1122 = vmatprep.subr.mxu0 0.0
        %1123 = vmatpush1.msra.mxu0 0.0
        %1124 = vmatprep.subr.mxu0 0.0
        %1125 = vmatpush1.msra.mxu0 0.0
        %1126 = vmatprep.subr.mxu0 0.0
        %1127 = vmatpush1.msra.mxu0 0.0
        %1128 = vmatprep.subr.mxu0 0.0
        %1129 = vmatpush1.msra.mxu0 0.0
        %1130 = vmatprep.subr.mxu0 0.0
        %1131 = vmatpush1.msra.mxu0 0.0
        %1132 = vmatprep.subr.mxu0 0.0
        %1133 = vmatpush1.msra.mxu0 0.0
        %1134 = vmatprep.subr.mxu0 0.0
        %1135 = vmatpush1.msra.mxu0 0.0
        %1136 = vmatprep.subr.mxu0 0.0
        %1137 = vmatpush1.msra.mxu0 0.0
        %1138 = vmatprep.subr.mxu0 0.0
        %1139 = vmatpush1.msra.mxu0 0.0
        %1140 = vmatprep.subr.mxu0 0.0
        %1141 = vmatpush1.msra.mxu0 0.0
        %1142 = vmatprep.subr.mxu0 0.0
        %1143 = vmatpush1.msra.mxu0 0.0
        %1144 = vmatprep.subr.mxu0 0.0
        %1145 = vmatpush1.msra.mxu0 0.0
        %1146 = vmatprep.subr.mxu0 0.0
        %1147 = vmatpush1.msra.mxu0 0.0
        %1148 = vmatprep.subr.mxu0 0.0
        %1149 = vmatpush1.msra.mxu0 0.0
        %1150 = vmatprep.subr.mxu0 0.0
        %1151 = vmatpush1.msra.mxu0 0.0
        %1152 = vmatprep.subr.mxu0 0.0
        %1153 = vmatpush1.msra.mxu0 0.0
        %1154 = vmatprep.subr.mxu0 0.0
        %1155 = vmatpush1.msra.mxu0 0.0
        %1156 = vmatprep.mubr.f32.mxu0 0.0
        %v1157 = vand.u32 %v236, 4294901760
        %1158 = vmatmul.mubr.f32.gmra.mrb[0].mxu0 %v1157
        %v1159 = vpop.f32.mrb[0].mxu0
        %v1160 = vadd.f32 %v1075, %v1159
        %v1161 = vpop.f32.mrb[0].mxu0
        %1162 = vmatprep.mubr.f32.mxu0 0.0
        %v1163 = vand.u32 %v239, 4294901760
        %1164 = vmatmul.mubr.f32.gmra.mrb[0].mxu0 %v1163
        %v1165 = vpop.f32.mrb[0].mxu0
        %v1166 = vadd.f32 %v1083, %v1165
        %v1167 = vpop.f32.mrb[0].mxu0
        %1168 = vdwg.mxu0
        %1169 = vmatprep.subr.mxu0 0.0
        %v1170 = vand.u32 %v734, 4294901760
        %1171 = vmatpush1.msra.mxu0 %v1170
        %1172 = vmatprep.subr.mxu0 0.0
        %v1173 = vand.u32 %v740, 4294901760
        %1174 = vmatpush1.msra.mxu0 %v1173
        %1175 = vmatprep.subr.mxu0 0.0
        %1176 = vmatpush1.msra.mxu0 0.0
        %1177 = vmatprep.subr.mxu0 0.0
        %1178 = vmatpush1.msra.mxu0 0.0
        %1179 = vmatprep.subr.mxu0 0.0
        %1180 = vmatpush1.msra.mxu0 0.0
        %1181 = vmatprep.subr.mxu0 0.0
        %1182 = vmatpush1.msra.mxu0 0.0
        %1183 = vmatprep.subr.mxu0 0.0
        %1184 = vmatpush1.msra.mxu0 0.0
        %1185 = vmatprep.subr.mxu0 0.0
        %1186 = vmatpush1.msra.mxu0 0.0
        %1187 = vmatprep.subr.mxu0 0.0
        %1188 = vmatpush1.msra.mxu0 0.0
        %1189 = vmatprep.subr.mxu0 0.0
        %1190 = vmatpush1.msra.mxu0 0.0
        %1191 = vmatprep.subr.mxu0 0.0
        %1192 = vmatpush1.msra.mxu0 0.0
        %1193 = vmatprep.subr.mxu0 0.0
        %1194 = vmatpush1.msra.mxu0 0.0
        %1195 = vmatprep.subr.mxu0 0.0
        %1196 = vmatpush1.msra.mxu0 0.0
        %1197 = vmatprep.subr.mxu0 0.0
        %1198 = vmatpush1.msra.mxu0 0.0
        %1199 = vmatprep.subr.mxu0 0.0
        %1200 = vmatpush1.msra.mxu0 0.0
        %1201 = vmatprep.subr.mxu0 0.0
        %1202 = vmatpush1.msra.mxu0 0.0
        %1203 = vmatprep.subr.mxu0 0.0
        %1204 = vmatpush1.msra.mxu0 0.0
        %1205 = vmatprep.subr.mxu0 0.0
        %1206 = vmatpush1.msra.mxu0 0.0
        %1207 = vmatprep.subr.mxu0 0.0
        %1208 = vmatpush1.msra.mxu0 0.0
        %1209 = vmatprep.subr.mxu0 0.0
        %1210 = vmatpush1.msra.mxu0 0.0
        %1211 = vmatprep.subr.mxu0 0.0
        %1212 = vmatpush1.msra.mxu0 0.0
        %1213 = vmatprep.subr.mxu0 0.0
        %1214 = vmatpush1.msra.mxu0 0.0
        %1215 = vmatprep.subr.mxu0 0.0
        %1216 = vmatpush1.msra.mxu0 0.0
        %1217 = vmatprep.subr.mxu0 0.0
        %1218 = vmatpush1.msra.mxu0 0.0
        %1219 = vmatprep.subr.mxu0 0.0
        %1220 = vmatpush1.msra.mxu0 0.0
        %1221 = vmatprep.subr.mxu0 0.0
        %1222 = vmatpush1.msra.mxu0 0.0
        %1223 = vmatprep.subr.mxu0 0.0
        %1224 = vmatpush1.msra.mxu0 0.0
        %1225 = vmatprep.subr.mxu0 0.0
        %1226 = vmatpush1.msra.mxu0 0.0
        %1227 = vmatprep.subr.mxu0 0.0
        %1228 = vmatpush1.msra.mxu0 0.0
        %1229 = vmatprep.subr.mxu0 0.0
        %1230 = vmatpush1.msra.mxu0 0.0
        %1231 = vmatprep.subr.mxu0 0.0
        %1232 = vmatpush1.msra.mxu0 0.0
        %1233 = vmatprep.subr.mxu0 0.0
        %1234 = vmatpush1.msra.mxu0 0.0
        %1235 = vmatprep.mubr.f32.mxu0 0.0
        %v1236 = vand.u32 %v236, 4294901760
        %1237 = vmatmul.mubr.f32.gmra.mrb[0].mxu0 %v1236
        %v1238 = vpop.f32.mrb[0].mxu0
        %v1239 = vadd.f32 %v1160, %v1238
        %v1240 = vpop.f32.mrb[0].mxu0
        %1241 = vmatprep.mubr.f32.mxu0 0.0
        %v1242 = vand.u32 %v239, 4294901760
        %1243 = vmatmul.mubr.f32.gmra.mrb[0].mxu0 %v1242
        %v1244 = vpop.f32.mrb[0].mxu0
        %v1245 = vadd.f32 %v1166, %v1244
        %v1246 = vpop.f32.mrb[0].mxu0
        %1247 = vdwg.mxu0
        %s1248 = scalar_lea.vmem %s197, 16 [#allocation7]
        %1249 = vst.msk [vmem:[%s1248] sm:$0xff] %vm743, %v1239
        %1250 = vst.msk [vmem:[%s1248 + $0x8] sm:$0xff] %vm743, %v1245
        %s1251 = sand.u32 %s94, 1
        %s1252 = scalar_lea.sflag [#allocation4], %s1251
        %s1253 = sand.u32 %s94, 1
        %s1254 = smul.addr %s1253, 32
        %s1255 = scalar_lea.vmem [#allocation7], %s1254
        // Predicated region
        $region37: #{tpu_custom_call.1} parent=27 // pred_check
          %p1256 = pneg %p104
        $region38: #{tpu_custom_call.1} parent=27 // pred_check_branch
          %1258 = sbr.rel (%p1256) target = $region40
        $region39: #{tpu_custom_call.1} parent=27 // pred_region
          %s1260 = ssub.s32 512, 512
          %1261 = vsyncadd %s1252, %s1260
          %s1262 = smul.addr %s25, 4
          %s1263 = sadd.s32 %s24, %s1262
          %s1264 = smul.addr %s1263, 128
          %s1265 = scalar_lea.hbm %s2, %s1264
          %s1266 = sshll.u32 %s1255, 4
          %s1267 = int_to_ptr.vmem [resolvable:$true] %s1266
          %1272 = dma.vmem_to_hbm [thread:$0]  %s1267, 512, %s1265, %s1252, 128, 128, 8
        $region40: #{tpu_custom_call.1} parent=27 // pred_fallthru
          _
      $region28: #{tpu_custom_call.1} parent=5 // pred_fallthru
        _
      %p1273 = scmp.le.s32.totalorder 2, %s15
      // Predicated region
      $region41: #{tpu_custom_call.1} parent=5 // pred_check
        %p1274 = pneg %p1273
      $region42: #{tpu_custom_call.1} parent=5 // pred_check_branch
        %1276 = sbr.rel (%p1274) target = $region44
      $region43: #{tpu_custom_call.1} parent=5 // pred_region
        %s1277 = ssub.s32 %s15, 2
        // Predicated region
        $region45: #{tpu_custom_call.1} parent=43 // pred_check
          %p1278 = pneg %p110
        $region46: #{tpu_custom_call.1} parent=43 // pred_check_branch
          %1280 = sbr.rel (%p1278) target = $region48
        $region47: #{tpu_custom_call.1} parent=43 // pred_region
          %s1281 = sand.u32 %s95, 1
          %s1282 = scalar_lea.sflag [#allocation4], %s1281
          %s1283 = sand.u32 %s95, 1
          %s1284 = smul.addr %s1283, 32
          %s1285 = scalar_lea.vmem [#allocation7], %s1284
          %1286 = dma.done %s1282, 512
        $region48: #{tpu_custom_call.1} parent=43 // pred_fallthru
          _
      $region44: #{tpu_custom_call.1} parent=5 // pred_fallthru
        _
    $region6: #{tpu_custom_call.1} parent=1 // loop_footer
      %s19 = sadd.s32 1, %s15
    $region7: #{tpu_custom_call.1} parent=1 // loop_footer_branch
      %14 = sbr.rel target = $region3
    $region8: #{tpu_custom_call.1} parent=1 // loop_exit
      _
    %1287 = vsyncpa [#allocation3], 1
    %s1288 = scalar_lea.sflag [#allocation3], 1
    %1289 = vsyncpa %s1288, 1
    %1290 = vsyncpa [#allocation6], 1
    %1291 = vsyncpa [#allocation4], 1
    %s1292 = scalar_lea.sflag [#allocation4], 1
    %1293 = vsyncpa %s1292, 1

</llo_original>
